<compile_context>
chip_gen: v5e
topology: v5e:2x2
jax: 0.10.0
libtpu: 0.0.40
codegen_flags: <defaults>
</compile_context>

<pallas_src>
import math
from functools import partial

import jax
import jax.numpy as jnp
from jax import lax
from jax.experimental import pallas as pl
from jax.experimental.pallas import tpu as pltpu


# ----------------------------- device helpers -------------------------------

def _device_kind():
    try:
        return jax.devices()[0].device_kind.lower()
    except Exception:
        return ""


def _is_v7(kind):
    return ("v7" in kind) or ("tpu7" in kind)


def _has_bf16_vpu(kind):
    # v6e / v7x have bf16 VALU + EUP; v5e (and unknown chips) do not.
    return ("v6" in kind) or _is_v7(kind)


def _vmem_limit_bytes(tsq, sk, d, h, dh):
    """Rough scoped-VMEM budget (with margin), capped generation-aware."""
    b16, b32 = 2, 4
    est = 0
    est += 2 * tsq * d * b16                    # Q block (double buffered, bf16)
    est += 2 * h * sk * dh * b16                # k_heads block
    est += 2 * sk * dh * b16                    # v_proj block
    est += 2 * (h * d * dh + dh * d) * b16      # Wq, Wo blocks
    est += 2 * (h * dh + d) * b32               # bq, bo blocks
    est += 2 * tsq * d * b32                    # output block
    est += 3 * tsq * sk * b32                   # scores / p / p_sum slabs
    est += tsq * (dh + d) * b32                 # epilogue intermediates
    est = int(est * 1.5) + (1 << 20)
    try:
        cap = int(pltpu.get_tpu_info().vmem_capacity_bytes)
    except Exception:
        cap = 64 * 1024 * 1024
    # Leave ~15% headroom for compiler internals; never below default scope.
    return max(min(est, int(cap * 0.85)), 32 * 1024 * 1024)


# --------------------------------- kernel -----------------------------------

def _imha_kernel(q_ref, kh_ref, vp_ref, wq_ref, bq_ref, wo_ref, bo_ref,
                 o_ref, *, num_heads, softmax_dtype):
    """One grid step == (one batch element, one Sq tile).

    q_ref  : (1, TSq, D)      bf16   raw query tile
    kh_ref : (1, H, Sk, dh)   bf16   pre-projected keys (per head, wrapper)
    vp_ref : (1, Sk, dh)      bf16   shared value projection (wrapper)
    wq_ref : (H, D, dh)       bf16   per-head query weights, pre-scaled 1/sqrt(dh)
    bq_ref : (H, 1, dh)       f32    per-head query biases, pre-scaled
    wo_ref : (dh, D)          bf16   output weights, pre-divided by H
    bo_ref : (1, D)           f32
    """
    f32 = jnp.float32
    bf16 = jnp.bfloat16

    q = q_ref[0]                                      # (TSq, D)  bf16
    tsq = q.shape[0]
    sk = kh_ref.shape[2]

    # All heads attend over the same v_proj and are averaged, so accumulate the
    # softmax probabilities and do ONE attention matmul at the end:
    #   mean_h(softmax_h @ v_proj) == (mean_h softmax_h) @ v_proj
    p_sum = jnp.zeros((tsq, sk), dtype=f32)

    # num_heads is small -> static unrolled loop (lets the scheduler overlap
    # head h's EUP/VPU softmax with head h+1's MXU pushes).
    for h in range(num_heads):
        # Per-head query projection: leading-axis weight index, no lane slices.
        q_h = (jnp.dot(q, wq_ref[h], preferred_element_type=f32)
               + bq_ref[h]).astype(bf16)              # (TSq, dh)
        k_h = kh_ref[0, h]                            # (Sk, dh) bf16

        # Contract the last dims directly -> no materialized k_h.T.
        scores = lax.dot_general(q_h, k_h, (((1,), (1,)), ((), ())),
                                 preferred_element_type=f32)      # (TSq, Sk)
        m = jnp.max(scores, axis=-1, keepdims=True)               # f32 stats
        p = jnp.exp((scores - m).astype(softmax_dtype))           # bf16 on v6e/v7x
        denom = jnp.sum(p.astype(f32), axis=-1, keepdims=True)    # f32 sum
        inv = pl.reciprocal(denom, approx=True)                   # EUP slot
        p_sum = p_sum + (p * inv.astype(softmax_dtype)).astype(f32)

    # Single attention matmul over the accumulated probabilities; the 1/H
    # averaging factor is folded into Wo on the host.
    head = jnp.dot(p_sum.astype(bf16), vp_ref[0],
                   preferred_element_type=f32)                     # (TSq, dh)
    out = (jnp.dot(head.astype(bf16), wo_ref[...],
                   preferred_element_type=f32) + bo_ref[...])      # (TSq, D)
    o_ref[0] = out.astype(o_ref.dtype)


# -------------------------------- wrapper ------------------------------------

def interpretable_mha(query, key, value, params, *, block_sq=None,
                      softmax_in_bf16=None):
    """query: (B, Sq, D); key/value: (B, Sk, D). Returns (B, Sq, D)."""
    B, Sq, D = query.shape
    Sk = key.shape[1]
    wq = params["wq"]                      # (H, D, dh)
    H, _, dh = wq.shape
    scale = 1.0 / math.sqrt(dh)

    bf16 = jnp.bfloat16
    f32 = jnp.float32

    kind = _device_kind()
    if block_sq is None:
        # v7x: 64 MiB VMEM per core -> smaller Sq tiles; v5e/v6e: 128 MiB.
        block_sq = 128 if _is_v7(kind) else 512
    if softmax_in_bf16 is None:
        softmax_in_bf16 = _has_bf16_vpu(kind)
    softmax_dtype = bf16 if softmax_in_bf16 else f32

    # ---- host-side weight prep (done once) ----
    wq_s = (wq * scale).astype(bf16)                          # (H, D, dh), scaled
    bq_s = (params["bq"] * scale).reshape(H, 1, dh).astype(f32)
    wo_s = (params["wo"] * (1.0 / H)).astype(bf16)            # fold 1/H into Wo
    bo_s = params["bo"].reshape(1, D).astype(f32)

    # ---- hoisted per-batch projections (computed once, not per Sq tile) ----
    k_bf = key.astype(bf16)
    v_bf = value.astype(bf16)
    k_heads = (jnp.einsum("bsd,hde->bhse", k_bf, params["wk"].astype(bf16),
                          preferred_element_type=f32)
               + params["bk"][None, :, None, :]).astype(bf16)  # (B, H, Sk, dh)
    v_proj = (jnp.einsum("bsd,de->bse", v_bf, params["wv"].astype(bf16),
                         preferred_element_type=f32)
              + params["bv"][None]).astype(bf16)               # (B, Sk, dh)

    q_bf = query.astype(bf16)
    out_dtype = query.dtype

    tsq = min(Sq, block_sq)
    n_sq = pl.cdiv(Sq, tsq)

    kernel = partial(_imha_kernel, num_heads=H, softmax_dtype=softmax_dtype)

    grid_spec = pltpu.PrefetchScalarGridSpec(
        num_scalar_prefetch=0,
        grid=(B, n_sq),
        in_specs=[
            pl.BlockSpec((1, tsq, D),     lambda b, s: (b, s, 0)),     # Q tile
            pl.BlockSpec((1, H, Sk, dh),  lambda b, s: (b, 0, 0, 0)),  # k_heads
            pl.BlockSpec((1, Sk, dh),     lambda b, s: (b, 0, 0)),     # v_proj
            pl.BlockSpec((H, D, dh),      lambda b, s: (0, 0, 0)),     # Wq (scaled)
            pl.BlockSpec((H, 1, dh),      lambda b, s: (0, 0, 0)),     # bq
            pl.BlockSpec((dh, D),         lambda b, s: (0, 0)),        # Wo (/H)
            pl.BlockSpec((1, D),          lambda b, s: (0, 0)),        # bo
        ],
        out_specs=pl.BlockSpec((1, tsq, D), lambda b, s: (b, s, 0)),
    )

    return pl.pallas_call(
        kernel,
        out_shape=jax.ShapeDtypeStruct((B, Sq, D), out_dtype),
        grid_spec=grid_spec,
        compiler_params=pltpu.CompilerParams(
            # Both axes are independent; on v7x they shard across the 2 TCs.
            dimension_semantics=("parallel", "parallel"),
            vmem_limit_bytes=_vmem_limit_bytes(tsq, Sk, D, H, dh)),
    )(q_bf, k_heads, v_proj, wq_s, bq_s, wo_s, bo_s)


# ------------------------- params / reference / test -------------------------

def _xavier_uniform(key, fan_in, fan_out, shape):
    bound = math.sqrt(6.0 / (fan_in + fan_out))
    return jax.random.uniform(key, shape, jnp.float32, -bound, bound)


def init_params(key, d_model, n_heads):
    dh = d_model // n_heads
    keys = jax.random.split(key, 4)
    # Per-head query/key projections, stored as (in, out) for direct x @ W.
    wq = _xavier_uniform(keys[0], d_model, dh, (n_heads, d_model, dh))
    wk = _xavier_uniform(keys[1], d_model, dh, (n_heads, d_model, dh))
    wv = _xavier_uniform(keys[2], d_model, dh, (d_model, dh))
    wo = _xavier_uniform(keys[3], dh, d_model, (dh, d_model))
    # All biases are initialized to zero in the module.
    return {
        "wq": wq, "bq": jnp.zeros((n_heads, dh), jnp.float32),
        "wk": wk, "bk": jnp.zeros((n_heads, dh), jnp.float32),
        "wv": wv, "bv": jnp.zeros((1, dh), jnp.float32),
        "wo": wo, "bo": jnp.zeros((1, d_model), jnp.float32),
    }


def reference_mha(query, key, value, params):
    """Pure-JAX f32 reference replicating the PyTorch forward (eval mode)."""
    H, D, dh = params["wq"].shape
    v_proj = value @ params["wv"] + params["bv"]                  # (B, Sk, dh)
    heads = []
    for h in range(H):
        q_h = query @ params["wq"][h] + params["bq"][h]           # (B, Sq, dh)
        k_h = key @ params["wk"][h] + params["bk"][h]             # (B, Sk, dh)
        scores = jnp.einsum("bqd,bkd->bqk", q_h, k_h) / math.sqrt(dh)
        p = jax.nn.softmax(scores, axis=-1)
        heads.append(jnp.einsum("bqk,bkd->bqd", p, v_proj))
    head = jnp.stack(heads, axis=2).mean(axis=2)                  # (B, Sq, dh)
    return head @ params["wo"] + params["bo"]


if __name__ == "__main__":
    # D chosen as a multiple of 128 so the output store is lane-dense.
    B, Sq, Sk, D, H = 2, 16, 16, 128, 4

    root = jax.random.PRNGKey(0)
    k_p, k_q, k_k, k_v = jax.random.split(root, 4)

    params = init_params(k_p, D, H)
    query = jax.random.normal(k_q, (B, Sq, D), jnp.float32)
    key = jax.random.normal(k_k, (B, Sk, D), jnp.float32)
    value = jax.random.normal(k_v, (B, Sk, D), jnp.float32)

    out = interpretable_mha(query, key, value, params)
    out = jax.block_until_ready(out)

    ref = reference_mha(query, key, value, params)
    assert out.shape == (B, Sq, D), out.shape
    # bf16 matmul inputs + (optional) bf16 softmax + approx reciprocal vs f32 ref.
    max_err = float(jnp.max(jnp.abs(out - ref)))
    assert jnp.allclose(out, ref, atol=5e-2, rtol=5e-2), max_err

    print("KERNEL_OK")
</pallas_src>

<mosaic_0001>
module attributes {stable_mosaic.version = 11 : i64} {
  func.func @_imha_kernel(%arg0: i32, %arg1: i32, %arg2: memref<1x16x128xbf16, #tpu.memory_space<vmem>>, %arg3: memref<1x4x16x32xbf16, #tpu.memory_space<vmem>>, %arg4: memref<1x16x32xbf16, #tpu.memory_space<vmem>>, %arg5: memref<4x128x32xbf16, #tpu.memory_space<vmem>>, %arg6: memref<4x1x32xf32, #tpu.memory_space<vmem>>, %arg7: memref<32x128xbf16, #tpu.memory_space<vmem>>, %arg8: memref<1x128xf32, #tpu.memory_space<vmem>>, %arg9: memref<1x16x128xf32, #tpu.memory_space<vmem>>) attributes {dimension_semantics = [#tpu.dimension_semantics<parallel>, #tpu.dimension_semantics<parallel>], iteration_bounds = array<i64: 2, 1>, scalar_prefetch = 0 : i64, scratch_operands = 0 : i64, tpu.core_type = #tpu.core_type<tc>, window_params = [{transform_indices = @transform_0, window_bounds = array<i64: 1, 16, 128>}, {transform_indices = @transform_1, window_bounds = array<i64: 1, 4, 16, 32>}, {transform_indices = @transform_2, window_bounds = array<i64: 1, 16, 32>}, {pipeline_mode = #tpu.pipeline_mode<synchronous>, transform_indices = @transform_3, window_bounds = array<i64: 4, 128, 32>}, {pipeline_mode = #tpu.pipeline_mode<synchronous>, transform_indices = @transform_4, window_bounds = array<i64: 4, 1, 32>}, {pipeline_mode = #tpu.pipeline_mode<synchronous>, transform_indices = @transform_5, window_bounds = array<i64: 32, 128>}, {pipeline_mode = #tpu.pipeline_mode<synchronous>, transform_indices = @transform_6, window_bounds = array<i64: 1, 128>}, {transform_indices = @transform_7, window_bounds = array<i64: 1, 16, 128>}]} {
    %c0 = arith.constant 0 : index
    %c0_0 = arith.constant 0 : index
    %c0_1 = arith.constant 0 : index
    %0 = vector.load %arg2[%c0, %c0_0, %c0_1] : memref<1x16x128xbf16, #tpu.memory_space<vmem>>, vector<1x16x128xbf16>
    %1 = vector.shape_cast %0 : vector<1x16x128xbf16> to vector<16x128xbf16>
    %cst = arith.constant 0.000000e+00 : f32
    %2 = vector.broadcast %cst : f32 to vector<16x16xf32>
    %c0_2 = arith.constant 0 : index
    %c0_3 = arith.constant 0 : index
    %c0_4 = arith.constant 0 : index
    %3 = vector.load %arg5[%c0_2, %c0_3, %c0_4] : memref<4x128x32xbf16, #tpu.memory_space<vmem>>, vector<1x128x32xbf16>
    %4 = vector.shape_cast %3 : vector<1x128x32xbf16> to vector<128x32xbf16>
    %cst_5 = arith.constant dense<0.000000e+00> : vector<16x32xf32>
    %5 = tpu.matmul %1, %4, %cst_5 {dimension_numbers = #tpu.dot_dimension_numbers<[1], [0], [0], [1], [0, 0, 1, 1], [], []>} : vector<16x128xbf16>, vector<128x32xbf16>, vector<16x32xf32> -> vector<16x32xf32>
    %c0_6 = arith.constant 0 : index
    %c0_7 = arith.constant 0 : index
    %c0_8 = arith.constant 0 : index
    %6 = vector.load %arg6[%c0_6, %c0_7, %c0_8] : memref<4x1x32xf32, #tpu.memory_space<vmem>>, vector<1x1x32xf32>
    %7 = vector.shape_cast %6 : vector<1x1x32xf32> to vector<1x32xf32>
    %8 = vector.broadcast %7 : vector<1x32xf32> to vector<16x32xf32>
    %9 = arith.addf %5, %8 : vector<16x32xf32>
    %10 = arith.truncf %9 : vector<16x32xf32> to vector<16x32xbf16>
    %c0_9 = arith.constant 0 : index
    %c0_10 = arith.constant 0 : index
    %c0_11 = arith.constant 0 : index
    %c0_12 = arith.constant 0 : index
    %11 = vector.load %arg3[%c0_9, %c0_10, %c0_11, %c0_12] : memref<1x4x16x32xbf16, #tpu.memory_space<vmem>>, vector<1x1x16x32xbf16>
    %12 = vector.shape_cast %11 : vector<1x1x16x32xbf16> to vector<16x32xbf16>
    %cst_13 = arith.constant dense<0.000000e+00> : vector<16x16xf32>
    %13 = tpu.matmul %10, %12, %cst_13 {dimension_numbers = #tpu.dot_dimension_numbers<[1], [1], [0], [0], [0, 0, 1, 0], [], []>} : vector<16x32xbf16>, vector<16x32xbf16>, vector<16x16xf32> -> vector<16x16xf32>
    %cst_14 = arith.constant dense<0xFF800000> : vector<16xf32>
    %14 = vector.multi_reduction <maximumf>, %13, %cst_14 [1] : vector<16x16xf32> to vector<16xf32>
    %15 = vector.shape_cast %14 : vector<16xf32> to vector<16x1xf32>
    %16 = vector.broadcast %15 : vector<16x1xf32> to vector<16x16xf32>
    %17 = arith.subf %13, %16 : vector<16x16xf32>
    %18 = math.exp %17 : vector<16x16xf32>
    %cst_15 = arith.constant dense<0.000000e+00> : vector<16xf32>
    %19 = vector.multi_reduction <add>, %18, %cst_15 [1] : vector<16x16xf32> to vector<16xf32>
    %20 = vector.shape_cast %19 : vector<16xf32> to vector<16x1xf32>
    %21 = tpu.reciprocal %20 {approx = true} : vector<16x1xf32> -> vector<16x1xf32>
    %22 = vector.broadcast %21 : vector<16x1xf32> to vector<16x16xf32>
    %23 = arith.mulf %18, %22 : vector<16x16xf32>
    %24 = arith.addf %2, %23 : vector<16x16xf32>
    %c1 = arith.constant 1 : index
    %c0_16 = arith.constant 0 : index
    %c0_17 = arith.constant 0 : index
    %25 = vector.load %arg5[%c1, %c0_16, %c0_17] : memref<4x128x32xbf16, #tpu.memory_space<vmem>>, vector<1x128x32xbf16>
    %26 = vector.shape_cast %25 : vector<1x128x32xbf16> to vector<128x32xbf16>
    %cst_18 = arith.constant dense<0.000000e+00> : vector<16x32xf32>
    %27 = tpu.matmul %1, %26, %cst_18 {dimension_numbers = #tpu.dot_dimension_numbers<[1], [0], [0], [1], [0, 0, 1, 1], [], []>} : vector<16x128xbf16>, vector<128x32xbf16>, vector<16x32xf32> -> vector<16x32xf32>
    %c1_19 = arith.constant 1 : index
    %c0_20 = arith.constant 0 : index
    %c0_21 = arith.constant 0 : index
    %28 = vector.load %arg6[%c1_19, %c0_20, %c0_21] : memref<4x1x32xf32, #tpu.memory_space<vmem>>, vector<1x1x32xf32>
    %29 = vector.shape_cast %28 : vector<1x1x32xf32> to vector<1x32xf32>
    %30 = vector.broadcast %29 : vector<1x32xf32> to vector<16x32xf32>
    %31 = arith.addf %27, %30 : vector<16x32xf32>
    %32 = arith.truncf %31 : vector<16x32xf32> to vector<16x32xbf16>
    %c0_22 = arith.constant 0 : index
    %c1_23 = arith.constant 1 : index
    %c0_24 = arith.constant 0 : index
    %c0_25 = arith.constant 0 : index
    %33 = vector.load %arg3[%c0_22, %c1_23, %c0_24, %c0_25] : memref<1x4x16x32xbf16, #tpu.memory_space<vmem>>, vector<1x1x16x32xbf16>
    %34 = vector.shape_cast %33 : vector<1x1x16x32xbf16> to vector<16x32xbf16>
    %cst_26 = arith.constant dense<0.000000e+00> : vector<16x16xf32>
    %35 = tpu.matmul %32, %34, %cst_26 {dimension_numbers = #tpu.dot_dimension_numbers<[1], [1], [0], [0], [0, 0, 1, 0], [], []>} : vector<16x32xbf16>, vector<16x32xbf16>, vector<16x16xf32> -> vector<16x16xf32>
    %cst_27 = arith.constant dense<0xFF800000> : vector<16xf32>
    %36 = vector.multi_reduction <maximumf>, %35, %cst_27 [1] : vector<16x16xf32> to vector<16xf32>
    %37 = vector.shape_cast %36 : vector<16xf32> to vector<16x1xf32>
    %38 = vector.broadcast %37 : vector<16x1xf32> to vector<16x16xf32>
    %39 = arith.subf %35, %38 : vector<16x16xf32>
    %40 = math.exp %39 : vector<16x16xf32>
    %cst_28 = arith.constant dense<0.000000e+00> : vector<16xf32>
    %41 = vector.multi_reduction <add>, %40, %cst_28 [1] : vector<16x16xf32> to vector<16xf32>
    %42 = vector.shape_cast %41 : vector<16xf32> to vector<16x1xf32>
    %43 = tpu.reciprocal %42 {approx = true} : vector<16x1xf32> -> vector<16x1xf32>
    %44 = vector.broadcast %43 : vector<16x1xf32> to vector<16x16xf32>
    %45 = arith.mulf %40, %44 : vector<16x16xf32>
    %46 = arith.addf %24, %45 : vector<16x16xf32>
    %c2 = arith.constant 2 : index
    %c0_29 = arith.constant 0 : index
    %c0_30 = arith.constant 0 : index
    %47 = vector.load %arg5[%c2, %c0_29, %c0_30] : memref<4x128x32xbf16, #tpu.memory_space<vmem>>, vector<1x128x32xbf16>
    %48 = vector.shape_cast %47 : vector<1x128x32xbf16> to vector<128x32xbf16>
    %cst_31 = arith.constant dense<0.000000e+00> : vector<16x32xf32>
    %49 = tpu.matmul %1, %48, %cst_31 {dimension_numbers = #tpu.dot_dimension_numbers<[1], [0], [0], [1], [0, 0, 1, 1], [], []>} : vector<16x128xbf16>, vector<128x32xbf16>, vector<16x32xf32> -> vector<16x32xf32>
    %c2_32 = arith.constant 2 : index
    %c0_33 = arith.constant 0 : index
    %c0_34 = arith.constant 0 : index
    %50 = vector.load %arg6[%c2_32, %c0_33, %c0_34] : memref<4x1x32xf32, #tpu.memory_space<vmem>>, vector<1x1x32xf32>
    %51 = vector.shape_cast %50 : vector<1x1x32xf32> to vector<1x32xf32>
    %52 = vector.broadcast %51 : vector<1x32xf32> to vector<16x32xf32>
    %53 = arith.addf %49, %52 : vector<16x32xf32>
    %54 = arith.truncf %53 : vector<16x32xf32> to vector<16x32xbf16>
    %c0_35 = arith.constant 0 : index
    %c2_36 = arith.constant 2 : index
    %c0_37 = arith.constant 0 : index
    %c0_38 = arith.constant 0 : index
    %55 = vector.load %arg3[%c0_35, %c2_36, %c0_37, %c0_38] : memref<1x4x16x32xbf16, #tpu.memory_space<vmem>>, vector<1x1x16x32xbf16>
    %56 = vector.shape_cast %55 : vector<1x1x16x32xbf16> to vector<16x32xbf16>
    %cst_39 = arith.constant dense<0.000000e+00> : vector<16x16xf32>
    %57 = tpu.matmul %54, %56, %cst_39 {dimension_numbers = #tpu.dot_dimension_numbers<[1], [1], [0], [0], [0, 0, 1, 0], [], []>} : vector<16x32xbf16>, vector<16x32xbf16>, vector<16x16xf32> -> vector<16x16xf32>
    %cst_40 = arith.constant dense<0xFF800000> : vector<16xf32>
    %58 = vector.multi_reduction <maximumf>, %57, %cst_40 [1] : vector<16x16xf32> to vector<16xf32>
    %59 = vector.shape_cast %58 : vector<16xf32> to vector<16x1xf32>
    %60 = vector.broadcast %59 : vector<16x1xf32> to vector<16x16xf32>
    %61 = arith.subf %57, %60 : vector<16x16xf32>
    %62 = math.exp %61 : vector<16x16xf32>
    %cst_41 = arith.constant dense<0.000000e+00> : vector<16xf32>
    %63 = vector.multi_reduction <add>, %62, %cst_41 [1] : vector<16x16xf32> to vector<16xf32>
    %64 = vector.shape_cast %63 : vector<16xf32> to vector<16x1xf32>
    %65 = tpu.reciprocal %64 {approx = true} : vector<16x1xf32> -> vector<16x1xf32>
    %66 = vector.broadcast %65 : vector<16x1xf32> to vector<16x16xf32>
    %67 = arith.mulf %62, %66 : vector<16x16xf32>
    %68 = arith.addf %46, %67 : vector<16x16xf32>
    %c3 = arith.constant 3 : index
    %c0_42 = arith.constant 0 : index
    %c0_43 = arith.constant 0 : index
    %69 = vector.load %arg5[%c3, %c0_42, %c0_43] : memref<4x128x32xbf16, #tpu.memory_space<vmem>>, vector<1x128x32xbf16>
    %70 = vector.shape_cast %69 : vector<1x128x32xbf16> to vector<128x32xbf16>
    %cst_44 = arith.constant dense<0.000000e+00> : vector<16x32xf32>
    %71 = tpu.matmul %1, %70, %cst_44 {dimension_numbers = #tpu.dot_dimension_numbers<[1], [0], [0], [1], [0, 0, 1, 1], [], []>} : vector<16x128xbf16>, vector<128x32xbf16>, vector<16x32xf32> -> vector<16x32xf32>
    %c3_45 = arith.constant 3 : index
    %c0_46 = arith.constant 0 : index
    %c0_47 = arith.constant 0 : index
    %72 = vector.load %arg6[%c3_45, %c0_46, %c0_47] : memref<4x1x32xf32, #tpu.memory_space<vmem>>, vector<1x1x32xf32>
    %73 = vector.shape_cast %72 : vector<1x1x32xf32> to vector<1x32xf32>
    %74 = vector.broadcast %73 : vector<1x32xf32> to vector<16x32xf32>
    %75 = arith.addf %71, %74 : vector<16x32xf32>
    %76 = arith.truncf %75 : vector<16x32xf32> to vector<16x32xbf16>
    %c0_48 = arith.constant 0 : index
    %c3_49 = arith.constant 3 : index
    %c0_50 = arith.constant 0 : index
    %c0_51 = arith.constant 0 : index
    %77 = vector.load %arg3[%c0_48, %c3_49, %c0_50, %c0_51] : memref<1x4x16x32xbf16, #tpu.memory_space<vmem>>, vector<1x1x16x32xbf16>
    %78 = vector.shape_cast %77 : vector<1x1x16x32xbf16> to vector<16x32xbf16>
    %cst_52 = arith.constant dense<0.000000e+00> : vector<16x16xf32>
    %79 = tpu.matmul %76, %78, %cst_52 {dimension_numbers = #tpu.dot_dimension_numbers<[1], [1], [0], [0], [0, 0, 1, 0], [], []>} : vector<16x32xbf16>, vector<16x32xbf16>, vector<16x16xf32> -> vector<16x16xf32>
    %cst_53 = arith.constant dense<0xFF800000> : vector<16xf32>
    %80 = vector.multi_reduction <maximumf>, %79, %cst_53 [1] : vector<16x16xf32> to vector<16xf32>
    %81 = vector.shape_cast %80 : vector<16xf32> to vector<16x1xf32>
    %82 = vector.broadcast %81 : vector<16x1xf32> to vector<16x16xf32>
    %83 = arith.subf %79, %82 : vector<16x16xf32>
    %84 = math.exp %83 : vector<16x16xf32>
    %cst_54 = arith.constant dense<0.000000e+00> : vector<16xf32>
    %85 = vector.multi_reduction <add>, %84, %cst_54 [1] : vector<16x16xf32> to vector<16xf32>
    %86 = vector.shape_cast %85 : vector<16xf32> to vector<16x1xf32>
    %87 = tpu.reciprocal %86 {approx = true} : vector<16x1xf32> -> vector<16x1xf32>
    %88 = vector.broadcast %87 : vector<16x1xf32> to vector<16x16xf32>
    %89 = arith.mulf %84, %88 : vector<16x16xf32>
    %90 = arith.addf %68, %89 : vector<16x16xf32>
    %91 = arith.truncf %90 : vector<16x16xf32> to vector<16x16xbf16>
    %c0_55 = arith.constant 0 : index
    %c0_56 = arith.constant 0 : index
    %c0_57 = arith.constant 0 : index
    %92 = vector.load %arg4[%c0_55, %c0_56, %c0_57] : memref<1x16x32xbf16, #tpu.memory_space<vmem>>, vector<1x16x32xbf16>
    %93 = vector.shape_cast %92 : vector<1x16x32xbf16> to vector<16x32xbf16>
    %cst_58 = arith.constant dense<0.000000e+00> : vector<16x32xf32>
    %94 = tpu.matmul %91, %93, %cst_58 {dimension_numbers = #tpu.dot_dimension_numbers<[1], [0], [0], [1], [0, 0, 1, 1], [], []>} : vector<16x16xbf16>, vector<16x32xbf16>, vector<16x32xf32> -> vector<16x32xf32>
    %95 = arith.truncf %94 : vector<16x32xf32> to vector<16x32xbf16>
    %c0_59 = arith.constant 0 : index
    %c0_60 = arith.constant 0 : index
    %96 = vector.load %arg7[%c0_59, %c0_60] : memref<32x128xbf16, #tpu.memory_space<vmem>>, vector<32x128xbf16>
    %cst_61 = arith.constant dense<0.000000e+00> : vector<16x128xf32>
    %97 = tpu.matmul %95, %96, %cst_61 {dimension_numbers = #tpu.dot_dimension_numbers<[1], [0], [0], [1], [0, 0, 1, 1], [], []>} : vector<16x32xbf16>, vector<32x128xbf16>, vector<16x128xf32> -> vector<16x128xf32>
    %c0_62 = arith.constant 0 : index
    %c0_63 = arith.constant 0 : index
    %98 = vector.load %arg8[%c0_62, %c0_63] : memref<1x128xf32, #tpu.memory_space<vmem>>, vector<1x128xf32>
    %99 = vector.broadcast %98 : vector<1x128xf32> to vector<16x128xf32>
    %100 = arith.addf %97, %99 : vector<16x128xf32>
    %c0_64 = arith.constant 0 : index
    %c0_65 = arith.constant 0 : index
    %c0_66 = arith.constant 0 : index
    %101 = vector.load %arg9[%c0_64, %c0_65, %c0_66] : memref<1x16x128xf32, #tpu.memory_space<vmem>>, vector<1x16x128xf32>
    %102 = vector.shape_cast %101 : vector<1x16x128xf32> to vector<16x128xf32>
    %103 = vector.shape_cast %100 : vector<16x128xf32> to vector<1x16x128xf32>
    tpu.vector_store %arg9[%c0_64, %c0_65, %c0_66], %103 {strides = array<i32>} : memref<1x16x128xf32, #tpu.memory_space<vmem>>, vector<1x16x128xf32>,
    return
  }
  func.func @transform_0(%arg0: i32, %arg1: i32) -> (i32, i32, i32) {
    %c0_i32 = arith.constant 0 : i32
    %c0_i32_0 = arith.constant 0 : i32
    return %arg0, %arg1, %c0_i32 : i32, i32, i32
  }
  func.func @transform_1(%arg0: i32, %arg1: i32) -> (i32, i32, i32, i32) {
    %c0_i32 = arith.constant 0 : i32
    %c0_i32_0 = arith.constant 0 : i32
    %c0_i32_1 = arith.constant 0 : i32
    %c0_i32_2 = arith.constant 0 : i32
    return %arg0, %c0_i32, %c0_i32_0, %c0_i32_1 : i32, i32, i32, i32
  }
  func.func @transform_2(%arg0: i32, %arg1: i32) -> (i32, i32, i32) {
    %c0_i32 = arith.constant 0 : i32
    %c0_i32_0 = arith.constant 0 : i32
    %c0_i32_1 = arith.constant 0 : i32
    return %arg0, %c0_i32, %c0_i32_0 : i32, i32, i32
  }
  func.func @transform_3(%arg0: i32, %arg1: i32) -> (i32, i32, i32) {
    %c0_i32 = arith.constant 0 : i32
    %c0_i32_0 = arith.constant 0 : i32
    %c0_i32_1 = arith.constant 0 : i32
    %c0_i32_2 = arith.constant 0 : i32
    return %c0_i32, %c0_i32_0, %c0_i32_1 : i32, i32, i32
  }
  func.func @transform_4(%arg0: i32, %arg1: i32) -> (i32, i32, i32) {
    %c0_i32 = arith.constant 0 : i32
    %c0_i32_0 = arith.constant 0 : i32
    %c0_i32_1 = arith.constant 0 : i32
    %c0_i32_2 = arith.constant 0 : i32
    return %c0_i32, %c0_i32_0, %c0_i32_1 : i32, i32, i32
  }
  func.func @transform_5(%arg0: i32, %arg1: i32) -> (i32, i32) {
    %c0_i32 = arith.constant 0 : i32
    %c0_i32_0 = arith.constant 0 : i32
    %c0_i32_1 = arith.constant 0 : i32
    return %c0_i32, %c0_i32_0 : i32, i32
  }
  func.func @transform_6(%arg0: i32, %arg1: i32) -> (i32, i32) {
    %c0_i32 = arith.constant 0 : i32
    %c0_i32_0 = arith.constant 0 : i32
    %c0_i32_1 = arith.constant 0 : i32
    return %c0_i32, %c0_i32_0 : i32, i32
  }
  func.func @transform_7(%arg0: i32, %arg1: i32) -> (i32, i32, i32) {
    %c0_i32 = arith.constant 0 : i32
    %c0_i32_0 = arith.constant 0 : i32
    return %arg0, %arg1, %c0_i32 : i32, i32, i32
  }
}

</mosaic_0001>

<llo_original>
// kernel: tpu_custom_call.1
$region0: #{tpu_custom_call.1}
  #allocation0 [shape = 'u32[]', space=smem, size = 0x4, offset = 0x4, fixed_abs, tag = 'smem constant byte address 0x4 - core index']
  #allocation1 [shape = 'u32[72,128]{1,0:T(1,128)}', space=vmem, size = 0x9000, scoped, tag = 'internal scratch']
  %s0 = inlined_call_operand.vmem [shape: bf16[2,16,128], index: 0, kind: input, shape index: {}]
  %s1 = inlined_call_operand.vmem [shape: bf16[2,4,16,32], index: 1, kind: input, shape index: {}]
  %s2 = inlined_call_operand.vmem [shape: bf16[2,16,32], index: 2, kind: input, shape index: {}]
  %s3 = inlined_call_operand.vmem [shape: bf16[4,128,32], index: 3, kind: input, shape index: {}]
  %s4 = inlined_call_operand.vmem [shape: f32[4,1,32], index: 4, kind: input, shape index: {}]
  %s5 = inlined_call_operand.vmem [shape: bf16[32,128], index: 5, kind: input, shape index: {}]
  %s6 = inlined_call_operand.vmem [shape: f32[1,128], index: 6, kind: input, shape index: {}]
  %s7 = inlined_call_operand.hbm [shape: f32[2,16,128], index: 7, kind: output, shape index: {}]
  %s8 = sld [smem:[#allocation0]]
  $region61: #{tpu_custom_call.1} parent=0
    _
  %s10 = ssub.s32 1, %s8
  %s11 = scalar_select 0, %s10, %s8
  $region1: #{tpu_custom_call.1} parent=0
    #allocation2 [shape = 'u8[16384]{0}', space=vmem, size = 0x4000, scoped, tag = 'output window, operand 0']
    #allocation3 [shape = 's32[2]{0}', space=sflag, size = 0x8, scoped, tag = 'scoped memory for tpu_custom_call.1']
    %12 = vsyncpa [#allocation3], 0
    %s13 = scalar_lea.sflag [#allocation3], 1
    %14 = vsyncpa %s13, 0
    loop: start=0, step=1, limit=4
    $region2: #{tpu_custom_call.1} parent=1 // loop_pre_header
      _
    $region3: #{tpu_custom_call.1} parent=1 // loop_header
      %s16 = sphi 0, %s20
      %p17 = scmp.ge.s32.totalorder %s16, 4
      %s23 = sphi 0, %s35
      %s24 = sphi 0, %s31
      %s25 = sphi 0, %s23
      %s26 = sphi 0, %s24
      %s27 = sphi 0, %s25
      %s28 = sphi 0, %s26
      %s40 = sphi 0, %s42
      %s43 = sphi 0, %s40
      %s44 = sphi 0, %s43
      %s60 = sphi 0, %s44
      %s66 = sphi 0, %s68
      %s69 = sphi 0, %s66
      %s70 = sphi 0, %s69
      %s86 = sphi 0, %s70
      %s92 = sphi 0, %s94
      %s95 = sphi 0, %s92
      %s96 = sphi 0, %s95
      %s112 = sphi 0, %s96
      %s116 = sphi 0, %s116
      %s118 = sphi 0, %s116
      %s119 = sphi 0, %s118
      %s133 = sphi 0, %s119
      %s137 = sphi 0, %s137
      %s139 = sphi 0, %s137
      %s140 = sphi 0, %s139
      %s154 = sphi 0, %s140
      %s158 = sphi 0, %s158
      %s160 = sphi 0, %s158
      %s161 = sphi 0, %s160
      %s175 = sphi 0, %s161
      %s179 = sphi 0, %s179
      %s181 = sphi 0, %s179
      %s182 = sphi 0, %s181
      %s196 = sphi 0, %s182
      %s204 = sphi 0, %s206
      %s207 = sphi 0, %s204
      %s208 = sphi 0, %s207
      %s224 = sphi 0, %s208
    $region4: #{tpu_custom_call.1} parent=1 // loop_header_branch
      %19 = sbr.rel (%p17) target = $region8
    $region5: #{tpu_custom_call.1} parent=1 // loop_body
      %s21 = ssub.s32 %s16, 1
      %s22 = ssub.s32 %s16, 2
      %s29 = sadd.s32 1, %s24
      %p30 = scmp.ge.s32.totalorder %s29, 1
      %s31 = scalar_select %p30, 0, %s29
      %s32 = sadd.s32 1, %s23
      %s33 = scalar_select %p30, %s32, %s23
      %p34 = scmp.ge.s32.totalorder %s33, 2
      %s35 = scalar_select %p34, 0, %s33
      %s36 = ssub.s32 %s23, %s35
      %s37 = ssub.s32 %s24, %s31
      %s38 = sor.u32 %s36, %s37
      %p39 = scmp.eq.s32.totalorder %s38, 0
      %s41 = sadd.s32 %s40, 1
      %s42 = scalar_select %p39, %s40, %s41
      %p45 = pneg %p39
      %p46 = scmp.eq.s32.totalorder %s16, 1
      %p47 = por %p45, %p46
      %p48 = scmp.ne.s32.totalorder %s40, %s43
      %p49 = scmp.eq.s32.totalorder %s16, 0
      %p50 = por %p48, %p49
      %p51 = scmp.ne.s32.totalorder %s40, %s43
      %p52 = scmp.eq.s32.totalorder %s21, 1
      %p53 = por %p51, %p52
      %p54 = scmp.ne.s32.totalorder %s43, %s44
      %p55 = scmp.eq.s32.totalorder %s21, 0
      %p56 = por %p54, %p55
      %p57 = scmp.ne.s32.totalorder %s43, %s44
      %p58 = scmp.eq.s32.totalorder %s22, 1
      %p59 = por %p57, %p58
      %p61 = scmp.ne.s32.totalorder %s44, %s60
      %p62 = scmp.eq.s32.totalorder %s22, 0
      %p63 = por %p61, %p62
      %s64 = ssub.s32 %s23, %s35
      %p65 = scmp.eq.s32.totalorder %s64, 0
      %s67 = sadd.s32 %s66, 1
      %s68 = scalar_select %p65, %s66, %s67
      %p71 = pneg %p65
      %p72 = scmp.eq.s32.totalorder %s16, 1
      %p73 = por %p71, %p72
      %p74 = scmp.ne.s32.totalorder %s66, %s69
      %p75 = scmp.eq.s32.totalorder %s16, 0
      %p76 = por %p74, %p75
      %p77 = scmp.ne.s32.totalorder %s66, %s69
      %p78 = scmp.eq.s32.totalorder %s21, 1
      %p79 = por %p77, %p78
      %p80 = scmp.ne.s32.totalorder %s69, %s70
      %p81 = scmp.eq.s32.totalorder %s21, 0
      %p82 = por %p80, %p81
      %p83 = scmp.ne.s32.totalorder %s69, %s70
      %p84 = scmp.eq.s32.totalorder %s22, 1
      %p85 = por %p83, %p84
      %p87 = scmp.ne.s32.totalorder %s70, %s86
      %p88 = scmp.eq.s32.totalorder %s22, 0
      %p89 = por %p87, %p88
      %s90 = ssub.s32 %s23, %s35
      %p91 = scmp.eq.s32.totalorder %s90, 0
      %s93 = sadd.s32 %s92, 1
      %s94 = scalar_select %p91, %s92, %s93
      %p97 = pneg %p91
      %p98 = scmp.eq.s32.totalorder %s16, 1
      %p99 = por %p97, %p98
      %p100 = scmp.ne.s32.totalorder %s92, %s95
      %p101 = scmp.eq.s32.totalorder %s16, 0
      %p102 = por %p100, %p101
      %p103 = scmp.ne.s32.totalorder %s92, %s95
      %p104 = scmp.eq.s32.totalorder %s21, 1
      %p105 = por %p103, %p104
      %p106 = scmp.ne.s32.totalorder %s95, %s96
      %p107 = scmp.eq.s32.totalorder %s21, 0
      %p108 = por %p106, %p107
      %p109 = scmp.ne.s32.totalorder %s95, %s96
      %p110 = scmp.eq.s32.totalorder %s22, 1
      %p111 = por %p109, %p110
      %p113 = scmp.ne.s32.totalorder %s96, %s112
      %p114 = scmp.eq.s32.totalorder %s22, 0
      %p115 = por %p113, %p114
      %s117 = sadd.s32 %s116, 1
      %p120 = scmp.eq.s32.totalorder %s16, 1
      %p121 = scmp.ne.s32.totalorder %s116, %s118
      %p122 = scmp.eq.s32.totalorder %s16, 0
      %p123 = por %p121, %p122
      %p124 = scmp.ne.s32.totalorder %s116, %s118
      %p125 = scmp.eq.s32.totalorder %s21, 1
      %p126 = por %p124, %p125
      %p127 = scmp.ne.s32.totalorder %s118, %s119
      %p128 = scmp.eq.s32.totalorder %s21, 0
      %p129 = por %p127, %p128
      %p130 = scmp.ne.s32.totalorder %s118, %s119
      %p131 = scmp.eq.s32.totalorder %s22, 1
      %p132 = por %p130, %p131
      %p134 = scmp.ne.s32.totalorder %s119, %s133
      %p135 = scmp.eq.s32.totalorder %s22, 0
      %p136 = por %p134, %p135
      %s138 = sadd.s32 %s137, 1
      %p141 = scmp.eq.s32.totalorder %s16, 1
      %p142 = scmp.ne.s32.totalorder %s137, %s139
      %p143 = scmp.eq.s32.totalorder %s16, 0
      %p144 = por %p142, %p143
      %p145 = scmp.ne.s32.totalorder %s137, %s139
      %p146 = scmp.eq.s32.totalorder %s21, 1
      %p147 = por %p145, %p146
      %p148 = scmp.ne.s32.totalorder %s139, %s140
      %p149 = scmp.eq.s32.totalorder %s21, 0
      %p150 = por %p148, %p149
      %p151 = scmp.ne.s32.totalorder %s139, %s140
      %p152 = scmp.eq.s32.totalorder %s22, 1
      %p153 = por %p151, %p152
      %p155 = scmp.ne.s32.totalorder %s140, %s154
      %p156 = scmp.eq.s32.totalorder %s22, 0
      %p157 = por %p155, %p156
      %s159 = sadd.s32 %s158, 1
      %p162 = scmp.eq.s32.totalorder %s16, 1
      %p163 = scmp.ne.s32.totalorder %s158, %s160
      %p164 = scmp.eq.s32.totalorder %s16, 0
      %p165 = por %p163, %p164
      %p166 = scmp.ne.s32.totalorder %s158, %s160
      %p167 = scmp.eq.s32.totalorder %s21, 1
      %p168 = por %p166, %p167
      %p169 = scmp.ne.s32.totalorder %s160, %s161
      %p170 = scmp.eq.s32.totalorder %s21, 0
      %p171 = por %p169, %p170
      %p172 = scmp.ne.s32.totalorder %s160, %s161
      %p173 = scmp.eq.s32.totalorder %s22, 1
      %p174 = por %p172, %p173
      %p176 = scmp.ne.s32.totalorder %s161, %s175
      %p177 = scmp.eq.s32.totalorder %s22, 0
      %p178 = por %p176, %p177
      %s180 = sadd.s32 %s179, 1
      %p183 = scmp.eq.s32.totalorder %s16, 1
      %p184 = scmp.ne.s32.totalorder %s179, %s181
      %p185 = scmp.eq.s32.totalorder %s16, 0
      %p186 = por %p184, %p185
      %p187 = scmp.ne.s32.totalorder %s179, %s181
      %p188 = scmp.eq.s32.totalorder %s21, 1
      %p189 = por %p187, %p188
      %p190 = scmp.ne.s32.totalorder %s181, %s182
      %p191 = scmp.eq.s32.totalorder %s21, 0
      %p192 = por %p190, %p191
      %p193 = scmp.ne.s32.totalorder %s181, %s182
      %p194 = scmp.eq.s32.totalorder %s22, 1
      %p195 = por %p193, %p194
      %p197 = scmp.ne.s32.totalorder %s182, %s196
      %p198 = scmp.eq.s32.totalorder %s22, 0
      %p199 = por %p197, %p198
      %s200 = ssub.s32 %s23, %s35
      %s201 = ssub.s32 %s24, %s31
      %s202 = sor.u32 %s200, %s201
      %p203 = scmp.eq.s32.totalorder %s202, 0
      %s205 = sadd.s32 %s204, 1
      %s206 = scalar_select %p203, %s204, %s205
      %p209 = pneg %p203
      %p210 = scmp.eq.s32.totalorder %s16, 1
      %p211 = por %p209, %p210
      %p212 = scmp.ne.s32.totalorder %s204, %s207
      %p213 = scmp.eq.s32.totalorder %s16, 0
      %p214 = por %p212, %p213
      %p215 = scmp.ne.s32.totalorder %s204, %s207
      %p216 = scmp.eq.s32.totalorder %s21, 1
      %p217 = por %p215, %p216
      %p218 = scmp.ne.s32.totalorder %s207, %s208
      %p219 = scmp.eq.s32.totalorder %s21, 0
      %p220 = por %p218, %p219
      %p221 = scmp.ne.s32.totalorder %s207, %s208
      %p222 = scmp.eq.s32.totalorder %s22, 1
      %p223 = por %p221, %p222
      %p225 = scmp.ne.s32.totalorder %s208, %s224
      %p226 = scmp.eq.s32.totalorder %s22, 0
      %p227 = por %p225, %p226
      %p228 = scmp.le.s32.totalorder 1, %s16
      %p229 = scmp.lt.s32.totalorder %s16, 3
      %p230 = pnand %p228, %p229
      %p231 = pneg %p230
      // Predicated region
      $region9: #{tpu_custom_call.1} parent=5 // pred_check
        _
      $region10: #{tpu_custom_call.1} parent=5 // pred_check_branch
        %233 = sbr.rel (%p230) target = $region12
      $region11: #{tpu_custom_call.1} parent=5 // pred_region
        %s234 = ssub.s32 %s16, 1
        // Predicated region
        $region13: #{tpu_custom_call.1} parent=11 // pred_check
          %p235 = pneg %p129
        $region14: #{tpu_custom_call.1} parent=11 // pred_check_branch
          %237 = sbr.rel (%p235) target = $region16
        $region15: #{tpu_custom_call.1} parent=11 // pred_region
          _
        $region16: #{tpu_custom_call.1} parent=11 // pred_fallthru
          _
        // Predicated region
        $region17: #{tpu_custom_call.1} parent=11 // pred_check
          %p238 = pneg %p150
        $region18: #{tpu_custom_call.1} parent=11 // pred_check_branch
          %240 = sbr.rel (%p238) target = $region20
        $region19: #{tpu_custom_call.1} parent=11 // pred_region
          _
        $region20: #{tpu_custom_call.1} parent=11 // pred_fallthru
          _
        // Predicated region
        $region21: #{tpu_custom_call.1} parent=11 // pred_check
          %p241 = pneg %p171
        $region22: #{tpu_custom_call.1} parent=11 // pred_check_branch
          %243 = sbr.rel (%p241) target = $region24
        $region23: #{tpu_custom_call.1} parent=11 // pred_region
          _
        $region24: #{tpu_custom_call.1} parent=11 // pred_fallthru
          _
        // Predicated region
        $region25: #{tpu_custom_call.1} parent=11 // pred_check
          %p244 = pneg %p192
        $region26: #{tpu_custom_call.1} parent=11 // pred_check_branch
          %246 = sbr.rel (%p244) target = $region28
        $region27: #{tpu_custom_call.1} parent=11 // pred_region
          _
        $region28: #{tpu_custom_call.1} parent=11 // pred_fallthru
          _
      $region12: #{tpu_custom_call.1} parent=5 // pred_fallthru
        _
      %p247 = scmp.lt.s32.totalorder %s16, 2
      // Predicated region
      $region29: #{tpu_custom_call.1} parent=5 // pred_check
        %p248 = pneg %p247
      $region30: #{tpu_custom_call.1} parent=5 // pred_check_branch
        %250 = sbr.rel (%p248) target = $region32
      $region31: #{tpu_custom_call.1} parent=5 // pred_region
        // Predicated region
        $region33: #{tpu_custom_call.1} parent=31 // pred_check
          %p251 = pneg %p50
        $region34: #{tpu_custom_call.1} parent=31 // pred_check_branch
          %253 = sbr.rel (%p251) target = $region36
        $region35: #{tpu_custom_call.1} parent=31 // pred_region
          %s254 = smul.u32 2, %s24
          %p255 = scmp.lt.s32.totalorder %s23, 1
          %s256 = scalar_select %p255, %s23, 1
          %p257 = scmp.lt.s32.totalorder %s254, 1
          %s258 = scalar_select %p257, %s254, 1
          %s259 = smul.addr %s256, 2
          %s260 = sadd.s32 %s258, %s259
          %s261 = smul.addr %s260, 4
          %s262 = scalar_lea.vmem %s0, %s261
          %s263 = smul.u32 2, %s24
        $region36: #{tpu_custom_call.1} parent=31 // pred_fallthru
          _
        // Predicated region
        $region37: #{tpu_custom_call.1} parent=31 // pred_check
          %p264 = pneg %p76
        $region38: #{tpu_custom_call.1} parent=31 // pred_check_branch
          %266 = sbr.rel (%p264) target = $region40
        $region39: #{tpu_custom_call.1} parent=31 // pred_region
          %p267 = scmp.lt.s32.totalorder %s23, 1
          %s268 = scalar_select %p267, %s23, 1
          %s269 = smul.addr %s268, 8
          %s270 = smul.addr %s269, 4
          %s271 = scalar_lea.vmem %s1, %s270
        $region40: #{tpu_custom_call.1} parent=31 // pred_fallthru
          _
        // Predicated region
        $region41: #{tpu_custom_call.1} parent=31 // pred_check
          %p272 = pneg %p102
        $region42: #{tpu_custom_call.1} parent=31 // pred_check_branch
          %274 = sbr.rel (%p272) target = $region44
        $region43: #{tpu_custom_call.1} parent=31 // pred_region
          %p275 = scmp.lt.s32.totalorder %s23, 1
          %s276 = scalar_select %p275, %s23, 1
          %s277 = smul.addr %s276, 2
          %s278 = smul.addr %s277, 4
          %s279 = scalar_lea.vmem %s2, %s278
        $region44: #{tpu_custom_call.1} parent=31 // pred_fallthru
          _
      $region32: #{tpu_custom_call.1} parent=5 // pred_fallthru
        _
      %p280 = scmp.le.s32.totalorder 1, %s16
      %p281 = scmp.lt.s32.totalorder %s16, 3
      %p282 = pnand %p280, %p281
      %p283 = pneg %p282
      // Predicated region
      $region45: #{tpu_custom_call.1} parent=5 // pred_check
        _
      $region46: #{tpu_custom_call.1} parent=5 // pred_check_branch
        %285 = sbr.rel (%p282) target = $region48
      $region47: #{tpu_custom_call.1} parent=5 // pred_region
        %s286 = ssub.s32 %s16, 1
        %s287 = smul.u32 2, %s26
        %p288 = scmp.lt.s32.totalorder %s25, 1
        %s289 = scalar_select %p288, %s25, 1
        %p290 = scmp.lt.s32.totalorder %s287, 1
        %s291 = scalar_select %p290, %s287, 1
        %s292 = smul.addr %s289, 2
        %s293 = sadd.s32 %s291, %s292
        %s294 = smul.addr %s293, 4
        %s295 = scalar_lea.vmem %s0, %s294
        %p296 = pneg %p56
        %p297 = pneg %p53
        %p298 = scmp.lt.s32.totalorder %s25, 1
        %s299 = scalar_select %p298, %s25, 1
        %s300 = smul.addr %s299, 8
        %s301 = smul.addr %s300, 4
        %s302 = scalar_lea.vmem %s1, %s301
        %p303 = pneg %p82
        %p304 = pneg %p79
        %p305 = scmp.lt.s32.totalorder %s25, 1
        %s306 = scalar_select %p305, %s25, 1
        %s307 = smul.addr %s306, 2
        %s308 = smul.addr %s307, 4
        %s309 = scalar_lea.vmem %s2, %s308
        %p310 = pneg %p108
        %p311 = pneg %p105
        %p312 = pneg %p129
        %p313 = pneg %p126
        %p314 = pneg %p150
        %p315 = pneg %p147
        %p316 = pneg %p171
        %p317 = pneg %p168
        %p318 = pneg %p192
        %p319 = pneg %p189
        %p320 = pneg %p220
        %p321 = pneg %p217
        %s322 = sand.u32 %s207, 1
        %s323 = scalar_lea.sflag [#allocation3], %s322
        %s324 = sand.u32 %s207, 1
        %s325 = smul.addr %s324, 16
        %s326 = scalar_lea.vmem [#allocation2], %s325
        %s327 = smul.u32 2, %s26
        %p328 = scmp.lt.s32.totalorder %s25, 1
        %s329 = scalar_select %p328, %s25, 1
        %p330 = scmp.lt.s32.totalorder %s327, 1
        %s331 = scalar_select %p330, %s327, 1
        %s332 = smul.addr %s329, 2
        %s333 = sadd.s32 %s331, %s332
        %s334 = smul.addr %s333, 4
        %s335 = scalar_lea.vmem %s0, %s334
        %s336 = smul.u32 2, %s26
        %p337 = scmp.lt.s32.totalorder %s25, 1
        %s338 = scalar_select %p337, %s25, 1
        %s339 = smul.addr %s338, 8
        %s340 = smul.addr %s339, 4
        %s341 = scalar_lea.vmem %s1, %s340
        %p342 = scmp.lt.s32.totalorder %s25, 1
        %s343 = scalar_select %p342, %s25, 1
        %s344 = smul.addr %s343, 2
        %s345 = smul.addr %s344, 4
        %s346 = scalar_lea.vmem %s2, %s345
        %s347 = smul.u32 2, %s26
        %v349 = vld [vmem:[%s335] sm:$0xf]
        %v350 = vld [vmem:[%s335 + $0x4] sm:$0xf]
        %v351 = vld [vmem:[%s3] sm:$0xf]
        %v352 = vld [vmem:[%s3 + $0x4] sm:$0xf]
        %v353 = vld [vmem:[%s3 + $0x8] sm:$0xf]
        %v354 = vld [vmem:[%s3 + $0xc] sm:$0xf]
        %v355 = vld [vmem:[%s3 + $0x10] sm:$0xf]
        %v356 = vld [vmem:[%s3 + $0x14] sm:$0xf]
        %v357 = vld [vmem:[%s3 + $0x18] sm:$0xf]
        %v358 = vld [vmem:[%s3 + $0x1c] sm:$0xf]
        %v359 = vld [vmem:[%s3 + $0x20] sm:$0xf]
        %v360 = vld [vmem:[%s3 + $0x24] sm:$0xf]
        %v361 = vld [vmem:[%s3 + $0x28] sm:$0xf]
        %v362 = vld [vmem:[%s3 + $0x2c] sm:$0xf]
        %v363 = vld [vmem:[%s3 + $0x30] sm:$0xf]
        %v364 = vld [vmem:[%s3 + $0x34] sm:$0xf]
        %v365 = vld [vmem:[%s3 + $0x38] sm:$0xf]
        %v366 = vld [vmem:[%s3 + $0x3c] sm:$0xf]
        %v367 = vld [vmem:[%s4] sm:$0x1]
        %v369 = vperm.slane %v367, 0
        %v373 = vunpack.c.l.b16 %v349
        %v374 = vunpack.c.l.b16 %v350
        %v375 = vpack.c.b16 %v374, %v373
        %v393 = vunpack.c.l.b16 %v351
        %v394 = vunpack.c.l.b16 %v352
        %v395 = vunpack.c.l.b16 %v353
        %v396 = vunpack.c.l.b16 %v354
        %v397 = vunpack.c.l.b16 %v355
        %v398 = vunpack.c.l.b16 %v356
        %v399 = vunpack.c.l.b16 %v357
        %v400 = vunpack.c.l.b16 %v358
        %v401 = vunpack.c.l.b16 %v359
        %v402 = vunpack.c.l.b16 %v360
        %v403 = vunpack.c.l.b16 %v361
        %v404 = vunpack.c.l.b16 %v362
        %v405 = vunpack.c.l.b16 %v363
        %v406 = vunpack.c.l.b16 %v364
        %v407 = vunpack.c.l.b16 %v365
        %v408 = vunpack.c.l.b16 %v366
        %v409 = vpack.c.b16 %v394, %v393
        %v410 = vpack.c.b16 %v396, %v395
        %v411 = vpack.c.b16 %v398, %v397
        %v412 = vpack.c.b16 %v400, %v399
        %v413 = vpack.c.b16 %v402, %v401
        %v414 = vpack.c.b16 %v404, %v403
        %v415 = vpack.c.b16 %v406, %v405
        %v416 = vpack.c.b16 %v408, %v407
        %425 = vmatpush.bf16.msra.mxu0 %v416
        %426 = vmatpush.bf16.msra.mxu0 %v415
        %427 = vmatpush.bf16.msra.mxu0 %v414
        %428 = vmatpush.bf16.msra.mxu0 %v413
        %429 = vmatpush.bf16.msra.mxu0 %v412
        %430 = vmatpush.bf16.msra.mxu0 %v411
        %431 = vmatpush.bf16.msra.mxu0 %v410
        %432 = vmatpush.bf16.msra.mxu0 %v409
        %433 = vmatmul.bf16.gmra.mxu0 %v375
        %v434 = vpop.f32.mrf.mxu0
        %v435 = vadd.f32 %v369, %v434
        %v436 = vpop.f32.mrf.mxu0
        %v437 = vadd.f32 %v369, %v436
        %438 = vdwg.mxu0
        %v439 = vpack.c.bf16 %v437, %v435
        %v440 = vld [vmem:[%s341] sm:$0xf]
        %v441 = vld [vmem:[%s341 + $0x4] sm:$0xf]
        %v444 = vunpack.c.l.b16 %v440
        %v445 = vunpack.c.l.b16 %v441
        %v446 = vpack.c.b16 %v445, %v444
        %vm447 = vcmask 261120
        %v449 = vsel %vm447, %v439, 0
        %v452 = vsel %vm447, %v446, 0
        %454 = vmatpush.bf16.xpose.msra.mxu0 0
        %455 = vmatpush.bf16.xpose.msra.mxu0 0
        %456 = vmatpush.bf16.xpose.msra.mxu0 0
        %457 = vmatpush.bf16.xpose.msra.mxu0 0
        %458 = vmatpush.bf16.xpose.msra.mxu0 0
        %459 = vmatpush.bf16.xpose.msra.mxu0 0
        %460 = vmatpush.bf16.xpose.msra.mxu0 0
        %461 = vmatpush.bf16.xpose.msra.mxu0 %v452
        %462 = vmatmul.bf16.gmra.mxu0 %v449
        %v463 = vpop.f32.mrf.mxu0
        %v464 = vadd.f32 0.0, %v463
        %v465 = vpop.f32.mrf.mxu0
        %v466 = vadd.f32 0.0, %v465
        %467 = vdwg.mxu0
        %vm468 = vcmask 130048
        %v469 = vsel %vm468, %v464, -inf
        %470 = vmax.xlane.f32.xlu0 %v469
        %v471 = vpop.xlane.xlu0 %470
        %v472 = vsel %vm468, %v466, -inf
        %473 = vmax.xlane.f32.xlu0 %v472
        %v474 = vpop.xlane.xlu0 %473
        %v475 = vsub.f32 %v464, %v471
        %v476 = vsub.f32 %v466, %v474
        %v477 = vmul.f32 %v475, 1.442695
        %v478 = vpow.pop %v477
        %v479 = vmul.f32 %v476, 1.442695
        %v480 = vpow.pop %v479
        %v481 = vsel %vm468, %v478, 0.0
        %482 = vadd.xlane.f32.xlu0 %v481
        %v483 = vpop.xlane.xlu0 %482
        %v484 = vsel %vm468, %v480, 0.0
        %485 = vadd.xlane.f32.xlu0 %v484
        %v486 = vpop.xlane.xlu0 %485
        %v487 = vrcp.pop %v483
        %v488 = vrcp.pop %v486
        %v489 = vmul.f32 %v478, %v487
        %v490 = vmul.f32 %v480, %v488
        %v491 = vadd.f32 %v489, 0.0
        %v492 = vadd.f32 %v490, 0.0
        %s493 = scalar_lea.vmem %s3, 64
        %v494 = vld [vmem:[%s493] sm:$0xf]
        %v495 = vld [vmem:[%s493 + $0x4] sm:$0xf]
        %v496 = vld [vmem:[%s493 + $0x8] sm:$0xf]
        %v497 = vld [vmem:[%s493 + $0xc] sm:$0xf]
        %v498 = vld [vmem:[%s493 + $0x10] sm:$0xf]
        %v499 = vld [vmem:[%s493 + $0x14] sm:$0xf]
        %v500 = vld [vmem:[%s493 + $0x18] sm:$0xf]
        %v501 = vld [vmem:[%s493 + $0x1c] sm:$0xf]
        %v502 = vld [vmem:[%s493 + $0x20] sm:$0xf]
        %v503 = vld [vmem:[%s493 + $0x24] sm:$0xf]
        %v504 = vld [vmem:[%s493 + $0x28] sm:$0xf]
        %v505 = vld [vmem:[%s493 + $0x2c] sm:$0xf]
        %v506 = vld [vmem:[%s493 + $0x30] sm:$0xf]
        %v507 = vld [vmem:[%s493 + $0x34] sm:$0xf]
        %v508 = vld [vmem:[%s493 + $0x38] sm:$0xf]
        %v509 = vld [vmem:[%s493 + $0x3c] sm:$0xf]
        %s510 = scalar_lea.vmem %s4, 1
        %v511 = vld [vmem:[%s510] sm:$0x1]
        %v513 = vperm.slane %v511, 0
        %v531 = vunpack.c.l.b16 %v494
        %v532 = vunpack.c.l.b16 %v495
        %v533 = vunpack.c.l.b16 %v496
        %v534 = vunpack.c.l.b16 %v497
        %v535 = vunpack.c.l.b16 %v498
        %v536 = vunpack.c.l.b16 %v499
        %v537 = vunpack.c.l.b16 %v500
        %v538 = vunpack.c.l.b16 %v501
        %v539 = vunpack.c.l.b16 %v502
        %v540 = vunpack.c.l.b16 %v503
        %v541 = vunpack.c.l.b16 %v504
        %v542 = vunpack.c.l.b16 %v505
        %v543 = vunpack.c.l.b16 %v506
        %v544 = vunpack.c.l.b16 %v507
        %v545 = vunpack.c.l.b16 %v508
        %v546 = vunpack.c.l.b16 %v509
        %v547 = vpack.c.b16 %v532, %v531
        %v548 = vpack.c.b16 %v534, %v533
        %v549 = vpack.c.b16 %v536, %v535
        %v550 = vpack.c.b16 %v538, %v537
        %v551 = vpack.c.b16 %v540, %v539
        %v552 = vpack.c.b16 %v542, %v541
        %v553 = vpack.c.b16 %v544, %v543
        %v554 = vpack.c.b16 %v546, %v545
        %563 = vmatpush.bf16.msra.mxu0 %v554
        %564 = vmatpush.bf16.msra.mxu0 %v553
        %565 = vmatpush.bf16.msra.mxu0 %v552
        %566 = vmatpush.bf16.msra.mxu0 %v551
        %567 = vmatpush.bf16.msra.mxu0 %v550
        %568 = vmatpush.bf16.msra.mxu0 %v549
        %569 = vmatpush.bf16.msra.mxu0 %v548
        %570 = vmatpush.bf16.msra.mxu0 %v547
        %571 = vmatmul.bf16.gmra.mxu0 %v375
        %v572 = vpop.f32.mrf.mxu0
        %v573 = vadd.f32 %v513, %v572
        %v574 = vpop.f32.mrf.mxu0
        %v575 = vadd.f32 %v513, %v574
        %576 = vdwg.mxu0
        %v577 = vpack.c.bf16 %v575, %v573
        %s578 = scalar_lea.vmem %s341, 8
        %v579 = vld [vmem:[%s578] sm:$0xf]
        %v580 = vld [vmem:[%s578 + $0x4] sm:$0xf]
        %v583 = vunpack.c.l.b16 %v579
        %v584 = vunpack.c.l.b16 %v580
        %v585 = vpack.c.b16 %v584, %v583
        %v587 = vsel %vm447, %v577, 0
        %v590 = vsel %vm447, %v585, 0
        %592 = vmatpush.bf16.xpose.msra.mxu0 0
        %593 = vmatpush.bf16.xpose.msra.mxu0 0
        %594 = vmatpush.bf16.xpose.msra.mxu0 0
        %595 = vmatpush.bf16.xpose.msra.mxu0 0
        %596 = vmatpush.bf16.xpose.msra.mxu0 0
        %597 = vmatpush.bf16.xpose.msra.mxu0 0
        %598 = vmatpush.bf16.xpose.msra.mxu0 0
        %599 = vmatpush.bf16.xpose.msra.mxu0 %v590
        %600 = vmatmul.bf16.gmra.mxu0 %v587
        %v601 = vpop.f32.mrf.mxu0
        %v602 = vadd.f32 0.0, %v601
        %v603 = vpop.f32.mrf.mxu0
        %v604 = vadd.f32 0.0, %v603
        %605 = vdwg.mxu0
        %v606 = vsel %vm468, %v602, -inf
        %607 = vmax.xlane.f32.xlu0 %v606
        %v608 = vpop.xlane.xlu0 %607
        %v609 = vsel %vm468, %v604, -inf
        %610 = vmax.xlane.f32.xlu0 %v609
        %v611 = vpop.xlane.xlu0 %610
        %v612 = vsub.f32 %v602, %v608
        %v613 = vsub.f32 %v604, %v611
        %v614 = vmul.f32 %v612, 1.442695
        %v615 = vpow.pop %v614
        %v616 = vmul.f32 %v613, 1.442695
        %v617 = vpow.pop %v616
        %v618 = vsel %vm468, %v615, 0.0
        %619 = vadd.xlane.f32.xlu0 %v618
        %v620 = vpop.xlane.xlu0 %619
        %v621 = vsel %vm468, %v617, 0.0
        %622 = vadd.xlane.f32.xlu0 %v621
        %v623 = vpop.xlane.xlu0 %622
        %v624 = vrcp.pop %v620
        %v625 = vrcp.pop %v623
        %v626 = vmul.f32 %v615, %v624
        %v627 = vmul.f32 %v617, %v625
        %v628 = vadd.f32 %v491, %v626
        %v629 = vadd.f32 %v492, %v627
        %s630 = scalar_lea.vmem %s3, 128
        %v631 = vld [vmem:[%s630] sm:$0xf]
        %v632 = vld [vmem:[%s630 + $0x4] sm:$0xf]
        %v633 = vld [vmem:[%s630 + $0x8] sm:$0xf]
        %v634 = vld [vmem:[%s630 + $0xc] sm:$0xf]
        %v635 = vld [vmem:[%s630 + $0x10] sm:$0xf]
        %v636 = vld [vmem:[%s630 + $0x14] sm:$0xf]
        %v637 = vld [vmem:[%s630 + $0x18] sm:$0xf]
        %v638 = vld [vmem:[%s630 + $0x1c] sm:$0xf]
        %v639 = vld [vmem:[%s630 + $0x20] sm:$0xf]
        %v640 = vld [vmem:[%s630 + $0x24] sm:$0xf]
        %v641 = vld [vmem:[%s630 + $0x28] sm:$0xf]
        %v642 = vld [vmem:[%s630 + $0x2c] sm:$0xf]
        %v643 = vld [vmem:[%s630 + $0x30] sm:$0xf]
        %v644 = vld [vmem:[%s630 + $0x34] sm:$0xf]
        %v645 = vld [vmem:[%s630 + $0x38] sm:$0xf]
        %v646 = vld [vmem:[%s630 + $0x3c] sm:$0xf]
        %s647 = scalar_lea.vmem %s4, 2
        %v648 = vld [vmem:[%s647] sm:$0x1]
        %v650 = vperm.slane %v648, 0
        %v668 = vunpack.c.l.b16 %v631
        %v669 = vunpack.c.l.b16 %v632
        %v670 = vunpack.c.l.b16 %v633
        %v671 = vunpack.c.l.b16 %v634
        %v672 = vunpack.c.l.b16 %v635
        %v673 = vunpack.c.l.b16 %v636
        %v674 = vunpack.c.l.b16 %v637
        %v675 = vunpack.c.l.b16 %v638
        %v676 = vunpack.c.l.b16 %v639
        %v677 = vunpack.c.l.b16 %v640
        %v678 = vunpack.c.l.b16 %v641
        %v679 = vunpack.c.l.b16 %v642
        %v680 = vunpack.c.l.b16 %v643
        %v681 = vunpack.c.l.b16 %v644
        %v682 = vunpack.c.l.b16 %v645
        %v683 = vunpack.c.l.b16 %v646
        %v684 = vpack.c.b16 %v669, %v668
        %v685 = vpack.c.b16 %v671, %v670
        %v686 = vpack.c.b16 %v673, %v672
        %v687 = vpack.c.b16 %v675, %v674
        %v688 = vpack.c.b16 %v677, %v676
        %v689 = vpack.c.b16 %v679, %v678
        %v690 = vpack.c.b16 %v681, %v680
        %v691 = vpack.c.b16 %v683, %v682
        %700 = vmatpush.bf16.msra.mxu0 %v691
        %701 = vmatpush.bf16.msra.mxu0 %v690
        %702 = vmatpush.bf16.msra.mxu0 %v689
        %703 = vmatpush.bf16.msra.mxu0 %v688
        %704 = vmatpush.bf16.msra.mxu0 %v687
        %705 = vmatpush.bf16.msra.mxu0 %v686
        %706 = vmatpush.bf16.msra.mxu0 %v685
        %707 = vmatpush.bf16.msra.mxu0 %v684
        %708 = vmatmul.bf16.gmra.mxu0 %v375
        %v709 = vpop.f32.mrf.mxu0
        %v710 = vadd.f32 %v650, %v709
        %v711 = vpop.f32.mrf.mxu0
        %v712 = vadd.f32 %v650, %v711
        %713 = vdwg.mxu0
        %v714 = vpack.c.bf16 %v712, %v710
        %s715 = scalar_lea.vmem %s341, 16
        %v716 = vld [vmem:[%s715] sm:$0xf]
        %v717 = vld [vmem:[%s715 + $0x4] sm:$0xf]
        %v720 = vunpack.c.l.b16 %v716
        %v721 = vunpack.c.l.b16 %v717
        %v722 = vpack.c.b16 %v721, %v720
        %v724 = vsel %vm447, %v714, 0
        %v727 = vsel %vm447, %v722, 0
        %729 = vmatpush.bf16.xpose.msra.mxu0 0
        %730 = vmatpush.bf16.xpose.msra.mxu0 0
        %731 = vmatpush.bf16.xpose.msra.mxu0 0
        %732 = vmatpush.bf16.xpose.msra.mxu0 0
        %733 = vmatpush.bf16.xpose.msra.mxu0 0
        %734 = vmatpush.bf16.xpose.msra.mxu0 0
        %735 = vmatpush.bf16.xpose.msra.mxu0 0
        %736 = vmatpush.bf16.xpose.msra.mxu0 %v727
        %737 = vmatmul.bf16.gmra.mxu0 %v724
        %v738 = vpop.f32.mrf.mxu0
        %v739 = vadd.f32 0.0, %v738
        %v740 = vpop.f32.mrf.mxu0
        %v741 = vadd.f32 0.0, %v740
        %742 = vdwg.mxu0
        %v743 = vsel %vm468, %v739, -inf
        %744 = vmax.xlane.f32.xlu0 %v743
        %v745 = vpop.xlane.xlu0 %744
        %v746 = vsel %vm468, %v741, -inf
        %747 = vmax.xlane.f32.xlu0 %v746
        %v748 = vpop.xlane.xlu0 %747
        %v749 = vsub.f32 %v739, %v745
        %v750 = vsub.f32 %v741, %v748
        %v751 = vmul.f32 %v749, 1.442695
        %v752 = vpow.pop %v751
        %v753 = vmul.f32 %v750, 1.442695
        %v754 = vpow.pop %v753
        %v755 = vsel %vm468, %v752, 0.0
        %756 = vadd.xlane.f32.xlu0 %v755
        %v757 = vpop.xlane.xlu0 %756
        %v758 = vsel %vm468, %v754, 0.0
        %759 = vadd.xlane.f32.xlu0 %v758
        %v760 = vpop.xlane.xlu0 %759
        %v761 = vrcp.pop %v757
        %v762 = vrcp.pop %v760
        %v763 = vmul.f32 %v752, %v761
        %v764 = vmul.f32 %v754, %v762
        %v765 = vadd.f32 %v628, %v763
        %v766 = vadd.f32 %v629, %v764
        %s767 = scalar_lea.vmem %s3, 192
        %v768 = vld [vmem:[%s767] sm:$0xf]
        %v769 = vld [vmem:[%s767 + $0x4] sm:$0xf]
        %v770 = vld [vmem:[%s767 + $0x8] sm:$0xf]
        %v771 = vld [vmem:[%s767 + $0xc] sm:$0xf]
        %v772 = vld [vmem:[%s767 + $0x10] sm:$0xf]
        %v773 = vld [vmem:[%s767 + $0x14] sm:$0xf]
        %v774 = vld [vmem:[%s767 + $0x18] sm:$0xf]
        %v775 = vld [vmem:[%s767 + $0x1c] sm:$0xf]
        %v776 = vld [vmem:[%s767 + $0x20] sm:$0xf]
        %v777 = vld [vmem:[%s767 + $0x24] sm:$0xf]
        %v778 = vld [vmem:[%s767 + $0x28] sm:$0xf]
        %v779 = vld [vmem:[%s767 + $0x2c] sm:$0xf]
        %v780 = vld [vmem:[%s767 + $0x30] sm:$0xf]
        %v781 = vld [vmem:[%s767 + $0x34] sm:$0xf]
        %v782 = vld [vmem:[%s767 + $0x38] sm:$0xf]
        %v783 = vld [vmem:[%s767 + $0x3c] sm:$0xf]
        %s784 = scalar_lea.vmem %s4, 3
        %v785 = vld [vmem:[%s784] sm:$0x1]
        %v787 = vperm.slane %v785, 0
        %v805 = vunpack.c.l.b16 %v768
        %v806 = vunpack.c.l.b16 %v769
        %v807 = vunpack.c.l.b16 %v770
        %v808 = vunpack.c.l.b16 %v771
        %v809 = vunpack.c.l.b16 %v772
        %v810 = vunpack.c.l.b16 %v773
        %v811 = vunpack.c.l.b16 %v774
        %v812 = vunpack.c.l.b16 %v775
        %v813 = vunpack.c.l.b16 %v776
        %v814 = vunpack.c.l.b16 %v777
        %v815 = vunpack.c.l.b16 %v778
        %v816 = vunpack.c.l.b16 %v779
        %v817 = vunpack.c.l.b16 %v780
        %v818 = vunpack.c.l.b16 %v781
        %v819 = vunpack.c.l.b16 %v782
        %v820 = vunpack.c.l.b16 %v783
        %v821 = vpack.c.b16 %v806, %v805
        %v822 = vpack.c.b16 %v808, %v807
        %v823 = vpack.c.b16 %v810, %v809
        %v824 = vpack.c.b16 %v812, %v811
        %v825 = vpack.c.b16 %v814, %v813
        %v826 = vpack.c.b16 %v816, %v815
        %v827 = vpack.c.b16 %v818, %v817
        %v828 = vpack.c.b16 %v820, %v819
        %837 = vmatpush.bf16.msra.mxu0 %v828
        %838 = vmatpush.bf16.msra.mxu0 %v827
        %839 = vmatpush.bf16.msra.mxu0 %v826
        %840 = vmatpush.bf16.msra.mxu0 %v825
        %841 = vmatpush.bf16.msra.mxu0 %v824
        %842 = vmatpush.bf16.msra.mxu0 %v823
        %843 = vmatpush.bf16.msra.mxu0 %v822
        %844 = vmatpush.bf16.msra.mxu0 %v821
        %845 = vmatmul.bf16.gmra.mxu0 %v375
        %v846 = vpop.f32.mrf.mxu0
        %v847 = vadd.f32 %v787, %v846
        %v848 = vpop.f32.mrf.mxu0
        %v849 = vadd.f32 %v787, %v848
        %850 = vdwg.mxu0
        %v851 = vpack.c.bf16 %v849, %v847
        %s852 = scalar_lea.vmem %s341, 24
        %v853 = vld [vmem:[%s852] sm:$0xf]
        %v854 = vld [vmem:[%s852 + $0x4] sm:$0xf]
        %v857 = vunpack.c.l.b16 %v853
        %v858 = vunpack.c.l.b16 %v854
        %v859 = vpack.c.b16 %v858, %v857
        %v861 = vsel %vm447, %v851, 0
        %v864 = vsel %vm447, %v859, 0
        %866 = vmatpush.bf16.xpose.msra.mxu0 0
        %867 = vmatpush.bf16.xpose.msra.mxu0 0
        %868 = vmatpush.bf16.xpose.msra.mxu0 0
        %869 = vmatpush.bf16.xpose.msra.mxu0 0
        %870 = vmatpush.bf16.xpose.msra.mxu0 0
        %871 = vmatpush.bf16.xpose.msra.mxu0 0
        %872 = vmatpush.bf16.xpose.msra.mxu0 0
        %873 = vmatpush.bf16.xpose.msra.mxu0 %v864
        %874 = vmatmul.bf16.gmra.mxu0 %v861
        %v875 = vpop.f32.mrf.mxu0
        %v876 = vadd.f32 0.0, %v875
        %v877 = vpop.f32.mrf.mxu0
        %v878 = vadd.f32 0.0, %v877
        %879 = vdwg.mxu0
        %v880 = vsel %vm468, %v876, -inf
        %881 = vmax.xlane.f32.xlu0 %v880
        %v882 = vpop.xlane.xlu0 %881
        %v883 = vsel %vm468, %v878, -inf
        %884 = vmax.xlane.f32.xlu0 %v883
        %v885 = vpop.xlane.xlu0 %884
        %v886 = vsub.f32 %v876, %v882
        %v887 = vsub.f32 %v878, %v885
        %v888 = vmul.f32 %v886, 1.442695
        %v889 = vpow.pop %v888
        %v890 = vmul.f32 %v887, 1.442695
        %v891 = vpow.pop %v890
        %v892 = vsel %vm468, %v889, 0.0
        %893 = vadd.xlane.f32.xlu0 %v892
        %v894 = vpop.xlane.xlu0 %893
        %v895 = vsel %vm468, %v891, 0.0
        %896 = vadd.xlane.f32.xlu0 %v895
        %v897 = vpop.xlane.xlu0 %896
        %v898 = vrcp.pop %v894
        %v899 = vrcp.pop %v897
        %v900 = vmul.f32 %v889, %v898
        %v901 = vmul.f32 %v891, %v899
        %v902 = vadd.f32 %v765, %v900
        %v903 = vadd.f32 %v766, %v901
        %v904 = vpack.c.bf16 %v903, %v902
        %v905 = vld [vmem:[%s346] sm:$0xf]
        %v906 = vld [vmem:[%s346 + $0x4] sm:$0xf]
        %v909 = vunpack.c.l.b16 %v905
        %v910 = vunpack.c.l.b16 %v906
        %v911 = vpack.c.b16 %v910, %v909
        %v914 = vsel %vm468, %v904, 0
        %916 = vmatpush.bf16.msra.mxu0 0
        %917 = vmatpush.bf16.msra.mxu0 0
        %918 = vmatpush.bf16.msra.mxu0 0
        %919 = vmatpush.bf16.msra.mxu0 0
        %920 = vmatpush.bf16.msra.mxu0 0
        %921 = vmatpush.bf16.msra.mxu0 0
        %922 = vmatpush.bf16.msra.mxu0 0
        %923 = vmatpush.bf16.msra.mxu0 %v911
        %924 = vmatmul.bf16.gmra.mxu0 %v914
        %v925 = vpop.f32.mrf.mxu0
        %v926 = vadd.f32 0.0, %v925
        %v927 = vpop.f32.mrf.mxu0
        %v928 = vadd.f32 0.0, %v927
        %929 = vdwg.mxu0
        %v930 = vpack.c.bf16 %v928, %v926
        %v931 = vld [vmem:[%s5] sm:$0xf]
        %v932 = vld [vmem:[%s5 + $0x4] sm:$0xf]
        %v933 = vld [vmem:[%s5 + $0x8] sm:$0xf]
        %v934 = vld [vmem:[%s5 + $0xc] sm:$0xf]
        %v935 = vld [vmem:[%s6] sm:$0x1]
        %v937 = vperm.slane %v935, 0
        %v943 = vunpack.c.l.b16 %v931
        %v944 = vunpack.c.l.b16 %v932
        %v945 = vunpack.c.l.b16 %v933
        %v946 = vunpack.c.l.b16 %v934
        %v947 = vpack.c.b16 %v944, %v943
        %v948 = vpack.c.b16 %v946, %v945
        %v952 = vsel %vm447, %v930, 0
        %954 = vmatpush.bf16.msra.mxu0 0
        %955 = vmatpush.bf16.msra.mxu0 0
        %956 = vmatpush.bf16.msra.mxu0 0
        %957 = vmatpush.bf16.msra.mxu0 0
        %958 = vmatpush.bf16.msra.mxu0 0
        %959 = vmatpush.bf16.msra.mxu0 0
        %960 = vmatpush.bf16.msra.mxu0 %v948
        %961 = vmatpush.bf16.msra.mxu0 %v947
        %962 = vmatmul.bf16.gmra.mxu0 %v952
        %v963 = vpop.f32.mrf.mxu0
        %v964 = vadd.f32 %v937, %v963
        %v965 = vpop.f32.mrf.mxu0
        %v966 = vadd.f32 %v937, %v965
        %967 = vdwg.mxu0
        %968 = vst [vmem:[%s326] sm:$0xff] %v964
        %969 = vst [vmem:[%s326 + $0x8] sm:$0xff] %v966
        %s970 = sand.u32 %s207, 1
        %s971 = scalar_lea.sflag [#allocation3], %s970
        %s972 = sand.u32 %s207, 1
        %s973 = smul.addr %s972, 16
        %s974 = scalar_lea.vmem [#allocation2], %s973
        // Predicated region
        $region49: #{tpu_custom_call.1} parent=47 // pred_check
          %p975 = pneg %p217
        $region50: #{tpu_custom_call.1} parent=47 // pred_check_branch
          %977 = sbr.rel (%p975) target = $region52
        $region51: #{tpu_custom_call.1} parent=47 // pred_region
          %s978 = smul.u32 2, %s26
          %980 = vsyncadd %s971, 0
          %s981 = smul.addr %s25, 2
          %s982 = sadd.s32 %s978, %s981
          %s983 = smul.addr %s982, 8
          %s984 = scalar_lea.hbm %s7, %s983
          %s985 = sshll.u32 %s974, 4
          %s986 = int_to_ptr.vmem [resolvable:$true] %s985
          %s987 = sshll.u32 %s984, 4
          %s988 = int_to_ptr.hbm [resolvable:$true] %s987
          %993 = dma.vmem_to_hbm [thread:$0]  %s986, 256, %s988, %s971, 128, 128, 8
        $region52: #{tpu_custom_call.1} parent=47 // pred_fallthru
          _
      $region48: #{tpu_custom_call.1} parent=5 // pred_fallthru
        _
      %p994 = scmp.le.s32.totalorder 2, %s16
      // Predicated region
      $region53: #{tpu_custom_call.1} parent=5 // pred_check
        %p995 = pneg %p994
      $region54: #{tpu_custom_call.1} parent=5 // pred_check_branch
        %997 = sbr.rel (%p995) target = $region56
      $region55: #{tpu_custom_call.1} parent=5 // pred_region
        %s998 = ssub.s32 %s16, 2
        // Predicated region
        $region57: #{tpu_custom_call.1} parent=55 // pred_check
          %p999 = pneg %p223
        $region58: #{tpu_custom_call.1} parent=55 // pred_check_branch
          %1001 = sbr.rel (%p999) target = $region60
        $region59: #{tpu_custom_call.1} parent=55 // pred_region
          %s1002 = sand.u32 %s208, 1
          %s1003 = scalar_lea.sflag [#allocation3], %s1002
          %s1004 = sand.u32 %s208, 1
          %s1005 = smul.addr %s1004, 16
          %s1006 = scalar_lea.vmem [#allocation2], %s1005
          %1008 = dma.done %s1003, 256
        $region60: #{tpu_custom_call.1} parent=55 // pred_fallthru
          _
      $region56: #{tpu_custom_call.1} parent=5 // pred_fallthru
        _
    $region6: #{tpu_custom_call.1} parent=1 // loop_footer
      %s20 = sadd.s32 1, %s16
    $region7: #{tpu_custom_call.1} parent=1 // loop_footer_branch
      %15 = sbr.rel target = $region3
    $region8: #{tpu_custom_call.1} parent=1 // loop_exit
      _
    %1009 = vsyncpa [#allocation3], 1
    %s1010 = scalar_lea.sflag [#allocation3], 1
    %1011 = vsyncpa %s1010, 1

</llo_original>
